<compile_context>
chip_gen: v5e
topology: v5e:2x2
jax: 0.10.0
libtpu: 0.0.40
codegen_flags: <defaults>
</compile_context>

<pallas_src>
import jax
import jax.numpy as jnp
from jax.experimental import pallas as pl
from jax.experimental.pallas import tpu as pltpu


def _round_up(x, m):
    return -(-x // m) * m


def _vmem_capacity_bytes():
    """Physical per-core VMEM; conservative fallback (v7x) if query fails."""
    try:
        info = pltpu.get_tpu_info()
        cap = getattr(info, "vmem_capacity_bytes", None)
        if cap:
            return int(cap)
    except Exception:
        pass
    return 64 << 20


def _block_bytes(shape, itemsize=4):
    lead = 1
    for s in shape[:-2]:
        lead *= s
    r = shape[-2] if len(shape) >= 2 else 1
    c = shape[-1]
    return lead * _round_up(r, 8) * _round_up(c, 128) * itemsize


def dkvmn_kernel(q_ref, qa_ref, mkT_ref, mvf_ref, w_ea_ref, b_ea_ref, e_ref, r_ref,
                 corr_ref, read_ref, newmem_ref):
    """Fused attention + read + write for one batch tile (lane-dense layout)."""
    ndv = e_ref.shape[-1]  # N * Dv (static)

    # --- attention / addressing (key head) ---
    # memory_key pre-transposed in the wrapper -> plain (TB,Dk)@(Dk,N) MXU matmul.
    sim = jnp.dot(q_ref[...], mkT_ref[...], preferred_element_type=jnp.float32)  # (TB,N)
    sim = sim - jnp.max(sim, axis=1, keepdims=True)        # stable softmax == F.softmax
    ex = jnp.exp(sim)
    corr = ex / jnp.sum(ex, axis=1, keepdims=True)          # (TB, N)
    corr_ref[...] = corr.astype(corr_ref.dtype)

    # Lane-dense expansion of corr via MXU (no cross-lane relayout):
    #   corr_f[b, n*Dv + d] = corr[b, n]
    corr_f = jnp.dot(corr, e_ref[...], preferred_element_type=jnp.float32)  # (TB, NDv)

    # --- read (value head), sharing the corr*mem product with the write path ---
    mvf = mvf_ref[...].astype(jnp.float32)                   # (TB, NDv) lane-dense
    cm = corr_f * mvf                                        # shared (TB, NDv) temp
    # read[b, d] = sum_n cm[b, n*Dv + d]  == one MXU reduction matmul
    read_ref[...] = jnp.dot(cm, r_ref[...],
                            preferred_element_type=jnp.float32).astype(read_ref.dtype)

    # --- write (value head): fused, pre-tiled (erase | add) linear ---
    ea = jnp.dot(qa_ref[...], w_ea_ref[...],
                 preferred_element_type=jnp.float32) + b_ea_ref[...]       # (TB, 2*NDv)
    erase_f = jax.nn.sigmoid(ea[:, :ndv])                    # tiled erase signal (TB,NDv)
    add_f = jnp.tanh(ea[:, ndv:])                            # tiled add signal   (TB,NDv)

    # mem*(1 - corr*erase) + corr*add  ==  mem - (corr*mem)*erase + corr*add
    newmem_ref[...] = (mvf - cm * erase_f + corr_f * add_f).astype(newmem_ref.dtype)
    # TODO(synk): PyTorch's partial-batch branch (add_mul.shape[0] < memory.shape[0])
    # is not needed here since batch sizes always match inside the kernel.


def _pick_batch_tile(B, per_row_bytes, budget_bytes):
    """Largest multiple-of-8 batch tile that fits the per-generation budget, with
    >= 2 grid steps whenever B > 8 (pipelining + v7x dual-TC batch sharding)."""
    if B <= 8:
        return B
    tb = max(8, (budget_bytes // per_row_bytes) // 8 * 8)
    tb = min(tb, _round_up(-(-B // 2), 8))   # at least two grid steps
    tb = min(tb, 1024)
    return tb


def dkvmn_forward(q_embed, qa_embed, memory_key, memory_value,
                  erase_w, erase_b, add_w, add_b, *, donate_memory_value=False):
    B, Dk = q_embed.shape
    N, _ = memory_key.shape
    Dv = memory_value.shape[-1]
    NDv = N * Dv
    mem_dtype = memory_value.dtype

    # ---- free layout plumbing in the wrapper ----
    mk_t = memory_key.T                                      # (Dk, N)
    # Fused, lane-tiled value-head weights: column n*Dv+d of each half is W^T[:, d].
    w_ea = jnp.concatenate([jnp.tile(erase_w.T, (1, N)),
                            jnp.tile(add_w.T, (1, N))], axis=1)            # (Dv, 2*NDv)
    b_ea = jnp.concatenate([jnp.tile(erase_b.reshape(1, Dv), (1, N)),
                            jnp.tile(add_b.reshape(1, Dv), (1, N))], axis=1)  # (1, 2*NDv)
    # Expansion matrix: corr (TB,N) @ E (N,NDv) -> lane-dense corr.
    expand_e = jnp.repeat(jnp.eye(N, dtype=jnp.float32), Dv, axis=1)        # (N, NDv)
    # Reduction matrix: cm (TB,NDv) @ R (NDv,Dv) -> per-slot sum (read content).
    reduce_r = jnp.tile(jnp.eye(Dv, dtype=jnp.float32), (N, 1))             # (NDv, Dv)
    # Lane-dense view of the dominant stream.
    mv_flat = memory_value.reshape(B, NDv)

    # ---- per-generation tile sizing ----
    itemsize = jnp.dtype(mem_dtype).itemsize
    vmem_cap = _vmem_capacity_bytes()                        # 128 MiB v5e/v6e, 64 MiB v7x
    vmem_limit = max(min(vmem_cap - (4 << 20), 100 << 20), 32 << 20)

    shared_bytes = 2 * (_block_bytes((Dk, N)) + _block_bytes((Dv, 2 * NDv))
                        + _block_bytes((1, 2 * NDv)) + _block_bytes((N, NDv))
                        + _block_bytes((NDv, Dv)))
    ndv_p = _round_up(NDv, 128)
    per_row = (  # double-buffered pipelined blocks + in-kernel f32 temporaries, per row
        2 * (4 * _round_up(Dk, 128) + 4 * _round_up(Dv, 128)          # q, qa in
             + 4 * _round_up(N, 128) + 4 * _round_up(Dv, 128)         # corr, read out
             + 2 * itemsize * ndv_p)                                   # mv in + newmem out
        + 10 * 4 * ndv_p)                                              # f32 temps (approx)
    budget = max(vmem_limit - shared_bytes - (8 << 20), 2 << 20)

    TB = _pick_batch_tile(B, per_row, budget)
    grid = (pl.cdiv(B, TB),)   # ragged last block OK: per-row math, OOB writes dropped

    in_specs = [
        pl.BlockSpec((TB, Dk), lambda i: (i, 0)),          # q_embed (batch-tiled)
        pl.BlockSpec((TB, Dv), lambda i: (i, 0)),          # qa_embed (batch-tiled)
        pl.BlockSpec((Dk, N), lambda i: (0, 0)),           # memory_key^T (shared)
        pl.BlockSpec((TB, NDv), lambda i: (i, 0)),         # memory_value, lane-dense
        pl.BlockSpec((Dv, 2 * NDv), lambda i: (0, 0)),     # fused tiled erase|add weight
        pl.BlockSpec((1, 2 * NDv), lambda i: (0, 0)),      # fused tiled erase|add bias
        pl.BlockSpec((N, NDv), lambda i: (0, 0)),          # corr expansion matrix
        pl.BlockSpec((NDv, Dv), lambda i: (0, 0)),         # read reduction matrix
    ]
    out_specs = (
        pl.BlockSpec((TB, N), lambda i: (i, 0)),           # correlation weight
        pl.BlockSpec((TB, Dv), lambda i: (i, 0)),          # read content
        pl.BlockSpec((TB, NDv), lambda i: (i, 0)),         # new memory value, lane-dense
    )
    out_shape = (
        jax.ShapeDtypeStruct((B, N), jnp.float32),
        jax.ShapeDtypeStruct((B, Dv), jnp.float32),
        jax.ShapeDtypeStruct((B, NDv), mem_dtype),
    )

    kwargs = {}
    if donate_memory_value:
        kwargs["input_output_aliases"] = {3: 2}            # mv_flat -> new_memory

    corr, read, newmem_flat = pl.pallas_call(
        dkvmn_kernel,
        grid=grid,
        out_shape=out_shape,
        in_specs=in_specs,
        out_specs=out_specs,
        compiler_params=pltpu.CompilerParams(
            dimension_semantics=("parallel",),
            vmem_limit_bytes=int(vmem_limit),
        ),
        **kwargs,
    )(q_embed, qa_embed, mk_t, mv_flat, w_ea, b_ea, expand_e, reduce_r)

    return corr, read, newmem_flat.reshape(B, N, Dv)


def _reference(q_embed, qa_embed, memory_key, memory_value,
               erase_w, erase_b, add_w, add_b):
    sim = q_embed @ memory_key.T
    corr = jax.nn.softmax(sim, axis=1)
    read = jnp.sum(corr[:, :, None] * memory_value, axis=1)
    erase = jax.nn.sigmoid(qa_embed @ erase_w.T + erase_b)
    add = jnp.tanh(qa_embed @ add_w.T + add_b)
    new_mem = memory_value * (1.0 - corr[:, :, None] * erase[:, None, :]) \
        + corr[:, :, None] * add[:, None, :]
    return corr, read, new_mem


if __name__ == "__main__":
    # Small, module-consistent shapes.
    B = 4                 # batch
    N = 16                # memory_size
    Dk = 32               # memory_key_state_dim
    Dv = 32               # memory_value_state_dim

    key = jax.random.PRNGKey(0)
    k1, k2, k3, k4, k5, k6 = jax.random.split(key, 6)

    # Inputs (control inputs = question / question-answer embeddings).
    q_embed = jax.random.normal(k1, (B, Dk), dtype=jnp.float32)
    qa_embed = jax.random.normal(k2, (B, Dv), dtype=jnp.float32)
    memory_key = jax.random.normal(k3, (N, Dk), dtype=jnp.float32)     # init_memory_key
    memory_value = jax.random.normal(k4, (B, N, Dv), dtype=jnp.float32)

    # Value (write) head parameters: Linear(Dv, Dv) x2, kaiming-normal weights
    # (fan_in = Dv), zero bias — initialized deterministically here.
    std = (2.0 / Dv) ** 0.5
    erase_w = std * jax.random.normal(k5, (Dv, Dv), dtype=jnp.float32)
    add_w = std * jax.random.normal(k6, (Dv, Dv), dtype=jnp.float32)
    erase_b = jnp.zeros((1, Dv), dtype=jnp.float32)
    add_b = jnp.zeros((1, Dv), dtype=jnp.float32)

    corr, read, new_mem = dkvmn_forward(
        q_embed, qa_embed, memory_key, memory_value,
        erase_w, erase_b, add_w, add_b)
    jax.block_until_ready((corr, read, new_mem))

    # Cross-check against a pure-JAX reference of the PyTorch semantics.
    corr_r, read_r, new_mem_r = _reference(
        q_embed, qa_embed, memory_key, memory_value,
        erase_w, erase_b, add_w, add_b)
    assert jnp.allclose(corr, corr_r, atol=1e-5, rtol=1e-5)
    assert jnp.allclose(read, read_r, atol=1e-5, rtol=1e-5)
    assert jnp.allclose(new_mem, new_mem_r, atol=1e-5, rtol=1e-5)

    print("KERNEL_OK")
</pallas_src>

<mosaic_0001>
module attributes {stable_mosaic.version = 11 : i64} {
  func.func @dkvmn_kernel(%arg0: i32, %arg1: memref<4x32xf32, #tpu.memory_space<vmem>>, %arg2: memref<4x32xf32, #tpu.memory_space<vmem>>, %arg3: memref<32x16xf32, #tpu.memory_space<vmem>>, %arg4: memref<4x512xf32, #tpu.memory_space<vmem>>, %arg5: memref<32x1024xf32, #tpu.memory_space<vmem>>, %arg6: memref<1x1024xf32, #tpu.memory_space<vmem>>, %arg7: memref<16x512xf32, #tpu.memory_space<vmem>>, %arg8: memref<512x32xf32, #tpu.memory_space<vmem>>, %arg9: memref<4x16xf32, #tpu.memory_space<vmem>>, %arg10: memref<4x32xf32, #tpu.memory_space<vmem>>, %arg11: memref<4x512xf32, #tpu.memory_space<vmem>>) attributes {dimension_semantics = [#tpu.dimension_semantics<parallel>], iteration_bounds = array<i64: 1>, scalar_prefetch = 0 : i64, scratch_operands = 0 : i64, tpu.core_type = #tpu.core_type<tc>, window_params = [{transform_indices = @transform_0, window_bounds = array<i64: 4, 32>}, {transform_indices = @transform_1, window_bounds = array<i64: 4, 32>}, {pipeline_mode = #tpu.pipeline_mode<synchronous>, transform_indices = @transform_2, window_bounds = array<i64: 32, 16>}, {transform_indices = @transform_3, window_bounds = array<i64: 4, 512>}, {pipeline_mode = #tpu.pipeline_mode<synchronous>, transform_indices = @transform_4, window_bounds = array<i64: 32, 1024>}, {pipeline_mode = #tpu.pipeline_mode<synchronous>, transform_indices = @transform_5, window_bounds = array<i64: 1, 1024>}, {pipeline_mode = #tpu.pipeline_mode<synchronous>, transform_indices = @transform_6, window_bounds = array<i64: 16, 512>}, {pipeline_mode = #tpu.pipeline_mode<synchronous>, transform_indices = @transform_7, window_bounds = array<i64: 512, 32>}, {transform_indices = @transform_8, window_bounds = array<i64: 4, 16>}, {transform_indices = @transform_9, window_bounds = array<i64: 4, 32>}, {transform_indices = @transform_10, window_bounds = array<i64: 4, 512>}]} {
    %c0 = arith.constant 0 : index
    %c0_0 = arith.constant 0 : index
    %0 = vector.load %arg1[%c0, %c0_0] : memref<4x32xf32, #tpu.memory_space<vmem>>, vector<4x32xf32>
    %c0_1 = arith.constant 0 : index
    %c0_2 = arith.constant 0 : index
    %1 = vector.load %arg3[%c0_1, %c0_2] : memref<32x16xf32, #tpu.memory_space<vmem>>, vector<32x16xf32>
    %cst = arith.constant dense<0.000000e+00> : vector<4x16xf32>
    %2 = tpu.matmul %0, %1, %cst {dimension_numbers = #tpu.dot_dimension_numbers<[1], [0], [0], [1], [0, 0, 1, 1], [], []>} : vector<4x32xf32>, vector<32x16xf32>, vector<4x16xf32> -> vector<4x16xf32>
    %cst_3 = arith.constant dense<0xFF800000> : vector<4xf32>
    %3 = vector.multi_reduction <maximumf>, %2, %cst_3 [1] : vector<4x16xf32> to vector<4xf32>
    %4 = vector.shape_cast %3 : vector<4xf32> to vector<4x1xf32>
    %5 = vector.broadcast %4 : vector<4x1xf32> to vector<4x16xf32>
    %6 = arith.subf %2, %5 : vector<4x16xf32>
    %7 = math.exp %6 : vector<4x16xf32>
    %cst_4 = arith.constant dense<0.000000e+00> : vector<4xf32>
    %8 = vector.multi_reduction <add>, %7, %cst_4 [1] : vector<4x16xf32> to vector<4xf32>
    %9 = vector.shape_cast %8 : vector<4xf32> to vector<4x1xf32>
    %10 = vector.broadcast %9 : vector<4x1xf32> to vector<4x16xf32>
    %11 = arith.divf %7, %10 : vector<4x16xf32>
    %c0_5 = arith.constant 0 : index
    %c0_6 = arith.constant 0 : index
    %12 = vector.load %arg9[%c0_5, %c0_6] : memref<4x16xf32, #tpu.memory_space<vmem>>, vector<4x16xf32>
    tpu.vector_store %arg9[%c0_5, %c0_6], %11 {strides = array<i32>} : memref<4x16xf32, #tpu.memory_space<vmem>>, vector<4x16xf32>,
    %c0_7 = arith.constant 0 : index
    %c0_8 = arith.constant 0 : index
    %13 = vector.load %arg7[%c0_7, %c0_8] : memref<16x512xf32, #tpu.memory_space<vmem>>, vector<16x512xf32>
    %cst_9 = arith.constant dense<0.000000e+00> : vector<4x512xf32>
    %14 = tpu.matmul %11, %13, %cst_9 {dimension_numbers = #tpu.dot_dimension_numbers<[1], [0], [0], [1], [0, 0, 1, 1], [], []>} : vector<4x16xf32>, vector<16x512xf32>, vector<4x512xf32> -> vector<4x512xf32>
    %c0_10 = arith.constant 0 : index
    %c0_11 = arith.constant 0 : index
    %15 = vector.load %arg4[%c0_10, %c0_11] : memref<4x512xf32, #tpu.memory_space<vmem>>, vector<4x512xf32>
    %16 = arith.mulf %14, %15 : vector<4x512xf32>
    %c0_12 = arith.constant 0 : index
    %c0_13 = arith.constant 0 : index
    %17 = vector.load %arg8[%c0_12, %c0_13] : memref<512x32xf32, #tpu.memory_space<vmem>>, vector<512x32xf32>
    %cst_14 = arith.constant dense<0.000000e+00> : vector<4x32xf32>
    %18 = tpu.matmul %16, %17, %cst_14 {dimension_numbers = #tpu.dot_dimension_numbers<[1], [0], [0], [1], [0, 0, 1, 1], [], []>} : vector<4x512xf32>, vector<512x32xf32>, vector<4x32xf32> -> vector<4x32xf32>
    %c0_15 = arith.constant 0 : index
    %c0_16 = arith.constant 0 : index
    %19 = vector.load %arg10[%c0_15, %c0_16] : memref<4x32xf32, #tpu.memory_space<vmem>>, vector<4x32xf32>
    tpu.vector_store %arg10[%c0_15, %c0_16], %18 {strides = array<i32>} : memref<4x32xf32, #tpu.memory_space<vmem>>, vector<4x32xf32>,
    %c0_17 = arith.constant 0 : index
    %c0_18 = arith.constant 0 : index
    %20 = vector.load %arg2[%c0_17, %c0_18] : memref<4x32xf32, #tpu.memory_space<vmem>>, vector<4x32xf32>
    %c0_19 = arith.constant 0 : index
    %c0_20 = arith.constant 0 : index
    %21 = vector.load %arg5[%c0_19, %c0_20] : memref<32x1024xf32, #tpu.memory_space<vmem>>, vector<32x1024xf32>
    %cst_21 = arith.constant dense<0.000000e+00> : vector<4x1024xf32>
    %22 = tpu.matmul %20, %21, %cst_21 {dimension_numbers = #tpu.dot_dimension_numbers<[1], [0], [0], [1], [0, 0, 1, 1], [], []>} : vector<4x32xf32>, vector<32x1024xf32>, vector<4x1024xf32> -> vector<4x1024xf32>
    %c0_22 = arith.constant 0 : index
    %c0_23 = arith.constant 0 : index
    %23 = vector.load %arg6[%c0_22, %c0_23] : memref<1x1024xf32, #tpu.memory_space<vmem>>, vector<1x1024xf32>
    %24 = vector.broadcast %23 : vector<1x1024xf32> to vector<4x1024xf32>
    %25 = arith.addf %22, %24 : vector<4x1024xf32>
    %26 = vector.extract_strided_slice %25 {offsets = [0, 0], sizes = [4, 512], strides = [1, 1]} : vector<4x1024xf32> to vector<4x512xf32>
    %27 = arith.negf %26 : vector<4x512xf32>
    %28 = math.exp %27 : vector<4x512xf32>
    %cst_24 = arith.constant 1.000000e+00 : f32
    %29 = vector.broadcast %cst_24 : f32 to vector<4x512xf32>
    %30 = arith.addf %29, %28 : vector<4x512xf32>
    %31 = arith.divf %29, %30 : vector<4x512xf32>
    %32 = vector.extract_strided_slice %25 {offsets = [0, 512], sizes = [4, 512], strides = [1, 1]} : vector<4x1024xf32> to vector<4x512xf32>
    %33 = math.tanh %32 : vector<4x512xf32>
    %34 = arith.mulf %16, %31 : vector<4x512xf32>
    %35 = arith.subf %15, %34 : vector<4x512xf32>
    %36 = arith.mulf %14, %33 : vector<4x512xf32>
    %37 = arith.addf %35, %36 : vector<4x512xf32>
    %c0_25 = arith.constant 0 : index
    %c0_26 = arith.constant 0 : index
    %38 = vector.load %arg11[%c0_25, %c0_26] : memref<4x512xf32, #tpu.memory_space<vmem>>, vector<4x512xf32>
    tpu.vector_store %arg11[%c0_25, %c0_26], %37 {strides = array<i32>} : memref<4x512xf32, #tpu.memory_space<vmem>>, vector<4x512xf32>,
    return
  }
  func.func @transform_0(%arg0: i32) -> (i32, i32) {
    %c0_i32 = arith.constant 0 : i32
    %c0_i32_0 = arith.constant 0 : i32
    return %arg0, %c0_i32 : i32, i32
  }
  func.func @transform_1(%arg0: i32) -> (i32, i32) {
    %c0_i32 = arith.constant 0 : i32
    %c0_i32_0 = arith.constant 0 : i32
    return %arg0, %c0_i32 : i32, i32
  }
  func.func @transform_2(%arg0: i32) -> (i32, i32) {
    %c0_i32 = arith.constant 0 : i32
    %c0_i32_0 = arith.constant 0 : i32
    %c0_i32_1 = arith.constant 0 : i32
    return %c0_i32, %c0_i32_0 : i32, i32
  }
  func.func @transform_3(%arg0: i32) -> (i32, i32) {
    %c0_i32 = arith.constant 0 : i32
    %c0_i32_0 = arith.constant 0 : i32
    return %arg0, %c0_i32 : i32, i32
  }
  func.func @transform_4(%arg0: i32) -> (i32, i32) {
    %c0_i32 = arith.constant 0 : i32
    %c0_i32_0 = arith.constant 0 : i32
    %c0_i32_1 = arith.constant 0 : i32
    return %c0_i32, %c0_i32_0 : i32, i32
  }
  func.func @transform_5(%arg0: i32) -> (i32, i32) {
    %c0_i32 = arith.constant 0 : i32
    %c0_i32_0 = arith.constant 0 : i32
    %c0_i32_1 = arith.constant 0 : i32
    return %c0_i32, %c0_i32_0 : i32, i32
  }
  func.func @transform_6(%arg0: i32) -> (i32, i32) {
    %c0_i32 = arith.constant 0 : i32
    %c0_i32_0 = arith.constant 0 : i32
    %c0_i32_1 = arith.constant 0 : i32
    return %c0_i32, %c0_i32_0 : i32, i32
  }
  func.func @transform_7(%arg0: i32) -> (i32, i32) {
    %c0_i32 = arith.constant 0 : i32
    %c0_i32_0 = arith.constant 0 : i32
    %c0_i32_1 = arith.constant 0 : i32
    return %c0_i32, %c0_i32_0 : i32, i32
  }
  func.func @transform_8(%arg0: i32) -> (i32, i32) {
    %c0_i32 = arith.constant 0 : i32
    %c0_i32_0 = arith.constant 0 : i32
    return %arg0, %c0_i32 : i32, i32
  }
  func.func @transform_9(%arg0: i32) -> (i32, i32) {
    %c0_i32 = arith.constant 0 : i32
    %c0_i32_0 = arith.constant 0 : i32
    return %arg0, %c0_i32 : i32, i32
  }
  func.func @transform_10(%arg0: i32) -> (i32, i32) {
    %c0_i32 = arith.constant 0 : i32
    %c0_i32_0 = arith.constant 0 : i32
    return %arg0, %c0_i32 : i32, i32
  }
}

</mosaic_0001>

<llo_original>
// kernel: tpu_custom_call.1
$region0: #{tpu_custom_call.1}
  #allocation0 [shape = 'u32[]', space=smem, size = 0x4, offset = 0x4, fixed_abs, tag = 'smem constant byte address 0x4 - core index']
  #allocation1 [shape = 'u32[72,128]{1,0:T(1,128)}', space=vmem, size = 0x9000, scoped, tag = 'internal scratch']
  %s0 = inlined_call_operand.vmem [shape: f32[4,32], index: 0, kind: input, shape index: {}]
  %s1 = inlined_call_operand.vmem [shape: f32[4,32], index: 1, kind: input, shape index: {}]
  %s2 = inlined_call_operand.vmem [shape: f32[32,16], index: 2, kind: input, shape index: {}]
  %s3 = inlined_call_operand.vmem [shape: f32[4,512], index: 3, kind: input, shape index: {}]
  %s4 = inlined_call_operand.vmem [shape: f32[32,1024], index: 4, kind: input, shape index: {}]
  %s5 = inlined_call_operand.vmem [shape: f32[1,1024], index: 5, kind: input, shape index: {}]
  %s6 = inlined_call_operand.vmem [shape: f32[16,512], index: 6, kind: input, shape index: {}]
  %s7 = inlined_call_operand.vmem [shape: f32[512,32], index: 7, kind: input, shape index: {}]
  %s8 = inlined_call_operand.hbm [shape: f32[4,16], index: 8, kind: output, shape index: {0}]
  %s9 = inlined_call_operand.hbm [shape: f32[4,32], index: 9, kind: output, shape index: {1}]
  %s10 = inlined_call_operand.hbm [shape: f32[4,512], index: 10, kind: output, shape index: {2}]
  %11 = xla_tuple %s8, %s9, %s10
  %s12 = sld [smem:[#allocation0]]
  $region58: #{tpu_custom_call.1} parent=0
    _
  %s14 = ssub.s32 1, %s12
  %s15 = scalar_select 0, %s14, %s12
  $region1: #{tpu_custom_call.1} parent=0
    #allocation2 [shape = 'u8[2048]{0}', space=vmem, size = 0x800, scoped, tag = 'output window, operand 0, single buffered']
    #allocation3 [shape = 's32[1]{0}', space=sflag, size = 0x4, scoped, tag = 'scoped memory for tpu_custom_call.1']
    #allocation4 [shape = 'u8[2048]{0}', space=vmem, size = 0x800, scoped, tag = 'output window, operand 1, single buffered']
    #allocation5 [shape = 's32[1]{0}', space=sflag, size = 0x4, scoped, tag = 'scoped memory for tpu_custom_call.1']
    #allocation6 [shape = 'u8[8192]{0}', space=vmem, size = 0x2000, scoped, tag = 'output window, operand 2, single buffered']
    %16 = vsyncpa [#allocation3], 0
    %17 = vsyncpa [#allocation5], 0
    // Predicated region
    $region2: #{tpu_custom_call.1} parent=1 // pred_check
      _
    $region3: #{tpu_custom_call.1} parent=1 // pred_check_branch
      %19 = sbr.rel (0) target = $region5
    $region4: #{tpu_custom_call.1} parent=1 // pred_region
      _
    $region5: #{tpu_custom_call.1} parent=1 // pred_fallthru
      _
    // Predicated region
    $region6: #{tpu_custom_call.1} parent=1 // pred_check
      _
    $region7: #{tpu_custom_call.1} parent=1 // pred_check_branch
      %21 = sbr.rel (0) target = $region9
    $region8: #{tpu_custom_call.1} parent=1 // pred_region
      _
    $region9: #{tpu_custom_call.1} parent=1 // pred_fallthru
      _
    // Predicated region
    $region10: #{tpu_custom_call.1} parent=1 // pred_check
      _
    $region11: #{tpu_custom_call.1} parent=1 // pred_check_branch
      %23 = sbr.rel (0) target = $region13
    $region12: #{tpu_custom_call.1} parent=1 // pred_region
      _
    $region13: #{tpu_custom_call.1} parent=1 // pred_fallthru
      _
    // Predicated region
    $region14: #{tpu_custom_call.1} parent=1 // pred_check
      _
    $region15: #{tpu_custom_call.1} parent=1 // pred_check_branch
      %25 = sbr.rel (0) target = $region17
    $region16: #{tpu_custom_call.1} parent=1 // pred_region
      _
    $region17: #{tpu_custom_call.1} parent=1 // pred_fallthru
      _
    // Predicated region
    $region18: #{tpu_custom_call.1} parent=1 // pred_check
      _
    $region19: #{tpu_custom_call.1} parent=1 // pred_check_branch
      %27 = sbr.rel (0) target = $region21
    $region20: #{tpu_custom_call.1} parent=1 // pred_region
      _
    $region21: #{tpu_custom_call.1} parent=1 // pred_fallthru
      _
    // Predicated region
    $region22: #{tpu_custom_call.1} parent=1 // pred_check
      _
    $region23: #{tpu_custom_call.1} parent=1 // pred_check_branch
      %29 = sbr.rel (0) target = $region25
    $region24: #{tpu_custom_call.1} parent=1 // pred_region
      _
    $region25: #{tpu_custom_call.1} parent=1 // pred_fallthru
      _
    // Predicated region
    $region26: #{tpu_custom_call.1} parent=1 // pred_check
      _
    $region27: #{tpu_custom_call.1} parent=1 // pred_check_branch
      %31 = sbr.rel (0) target = $region29
    $region28: #{tpu_custom_call.1} parent=1 // pred_region
      _
    $region29: #{tpu_custom_call.1} parent=1 // pred_fallthru
      _
    // Predicated region
    $region30: #{tpu_custom_call.1} parent=1 // pred_check
      _
    $region31: #{tpu_custom_call.1} parent=1 // pred_check_branch
      %33 = sbr.rel (0) target = $region33
    $region32: #{tpu_custom_call.1} parent=1 // pred_region
      _
    $region33: #{tpu_custom_call.1} parent=1 // pred_fallthru
      _
    %v34 = vld [vmem:[%s0] sm:$0xf]
    %v35 = vld [vmem:[%s2] sm:$0xff]
    %v36 = vld [vmem:[%s2 + $0x8] sm:$0xff]
    %v37 = vld [vmem:[%s2 + $0x10] sm:$0xff]
    %v38 = vld [vmem:[%s2 + $0x18] sm:$0xff]
    %vm39 = vcmask 261120
    %v41 = vsel %vm39, %v34, 0
    %43 = vmatpush.msra.mxu0 0.0
    %44 = vmatpush.msra.mxu0 0.0
    %45 = vmatpush.msra.mxu0 0.0
    %46 = vmatpush.msra.mxu0 0.0
    %47 = vmatpush.msra.mxu0 0.0
    %48 = vmatpush.msra.mxu0 0.0
    %49 = vmatpush.msra.mxu0 0.0
    %50 = vmatpush.msra.mxu0 0.0
    %51 = vmatpush.msra.mxu0 0.0
    %52 = vmatpush.msra.mxu0 0.0
    %53 = vmatpush.msra.mxu0 0.0
    %54 = vmatpush.msra.mxu0 0.0
    %55 = vmatpush.msra.mxu0 %v38
    %56 = vmatpush.msra.mxu0 %v37
    %57 = vmatpush.msra.mxu0 %v36
    %58 = vmatpush.msra.mxu0 %v35
    %59 = vmatmul.f32.gmra.mxu0 %v41
    %v60 = vpop.f32.mrf.mxu0
    %v61 = vadd.f32 0.0, %v60
    %62 = vdwg.mxu0
    %vm63 = vcmask 125952
    %v64 = vsel %vm63, %v61, -inf
    %65 = vmax.xlane.f32.xlu0 %v64
    %v66 = vpop.xlane.xlu0 %65
    %v67 = vsub.f32 %v61, %v66
    %v68 = vmul.f32 %v67, 1.442695
    %v69 = vpow.pop %v68
    %v70 = vsel %vm63, %v69, 0.0
    %71 = vadd.xlane.f32.xlu0 %v70
    %v72 = vpop.xlane.xlu0 %71
    %v73 = vrcp.pop %v72
    %v74 = vmul.f32 %v72, %v73
    %v75 = vsub.f32 1.0, %v74
    %v76 = vmul.f32 %v73, %v75
    %v77 = vadd.f32 %v73, %v76
    %vm78 = vweird.f32 %v72
    %vm79 = vweird.f32 %v73
    %vm80 = vmor %vm78, %vm79
    %v81 = vsel %vm80, %v73, %v77
    %v82 = vand.u32 2147483647, %v72
    %vm83 = vcmp.eq.f32.partialorder %v82, 8.507059e+37
    %v84 = vand.u32 %v72, 2147483648
    %v85 = vor.u32 1.1754944e-38, %v84
    %v86 = vsel %vm83, %v85, %v81
    %v87 = vmul.f32 %v69, %v86
    %88 = vst.msk [vmem:[#allocation2] sm:$0xf] %vm63, %v87
    %v89 = vld [vmem:[%s6] sm:$0xff]
    %v90 = vld [vmem:[%s6 + $0x8] sm:$0xff]
    %v91 = vld [vmem:[%s6 + $0x10] sm:$0xff]
    %v92 = vld [vmem:[%s6 + $0x18] sm:$0xff]
    %v93 = vld [vmem:[%s6 + $0x20] sm:$0xff]
    %v94 = vld [vmem:[%s6 + $0x28] sm:$0xff]
    %v95 = vld [vmem:[%s6 + $0x30] sm:$0xff]
    %v96 = vld [vmem:[%s6 + $0x38] sm:$0xff]
    %vm97 = vcmask 130048
    %v99 = vsel %vm97, %v87, 0
    %101 = vmatpush.msra.mxu0 0.0
    %102 = vmatpush.msra.mxu0 0.0
    %103 = vmatpush.msra.mxu0 0.0
    %104 = vmatpush.msra.mxu0 0.0
    %105 = vmatpush.msra.mxu0 0.0
    %106 = vmatpush.msra.mxu0 0.0
    %107 = vmatpush.msra.mxu0 0.0
    %108 = vmatpush.msra.mxu0 0.0
    %109 = vmatpush.msra.mxu0 0.0
    %110 = vmatpush.msra.mxu0 0.0
    %111 = vmatpush.msra.mxu0 0.0
    %112 = vmatpush.msra.mxu0 0.0
    %113 = vmatpush.msra.mxu0 0.0
    %114 = vmatpush.msra.mxu0 0.0
    %115 = vmatpush.msra.mxu0 %v93
    %116 = vmatpush.msra.mxu0 %v89
    %117 = vmatmul.f32.gmra.mxu0 %v99
    %v118 = vpop.f32.mrf.mxu0
    %v119 = vadd.f32 0.0, %v118
    %120 = vdwg.mxu0
    %121 = vmatpush.msra.mxu0 0.0
    %122 = vmatpush.msra.mxu0 0.0
    %123 = vmatpush.msra.mxu0 0.0
    %124 = vmatpush.msra.mxu0 0.0
    %125 = vmatpush.msra.mxu0 0.0
    %126 = vmatpush.msra.mxu0 0.0
    %127 = vmatpush.msra.mxu0 0.0
    %128 = vmatpush.msra.mxu0 0.0
    %129 = vmatpush.msra.mxu0 0.0
    %130 = vmatpush.msra.mxu0 0.0
    %131 = vmatpush.msra.mxu0 0.0
    %132 = vmatpush.msra.mxu0 0.0
    %133 = vmatpush.msra.mxu0 0.0
    %134 = vmatpush.msra.mxu0 0.0
    %135 = vmatpush.msra.mxu0 %v94
    %136 = vmatpush.msra.mxu0 %v90
    %137 = vmatmul.f32.gmra.mxu0 %v99
    %v138 = vpop.f32.mrf.mxu0
    %v139 = vadd.f32 0.0, %v138
    %140 = vdwg.mxu0
    %141 = vmatpush.msra.mxu0 0.0
    %142 = vmatpush.msra.mxu0 0.0
    %143 = vmatpush.msra.mxu0 0.0
    %144 = vmatpush.msra.mxu0 0.0
    %145 = vmatpush.msra.mxu0 0.0
    %146 = vmatpush.msra.mxu0 0.0
    %147 = vmatpush.msra.mxu0 0.0
    %148 = vmatpush.msra.mxu0 0.0
    %149 = vmatpush.msra.mxu0 0.0
    %150 = vmatpush.msra.mxu0 0.0
    %151 = vmatpush.msra.mxu0 0.0
    %152 = vmatpush.msra.mxu0 0.0
    %153 = vmatpush.msra.mxu0 0.0
    %154 = vmatpush.msra.mxu0 0.0
    %155 = vmatpush.msra.mxu0 %v95
    %156 = vmatpush.msra.mxu0 %v91
    %157 = vmatmul.f32.gmra.mxu0 %v99
    %v158 = vpop.f32.mrf.mxu0
    %v159 = vadd.f32 0.0, %v158
    %160 = vdwg.mxu0
    %161 = vmatpush.msra.mxu0 0.0
    %162 = vmatpush.msra.mxu0 0.0
    %163 = vmatpush.msra.mxu0 0.0
    %164 = vmatpush.msra.mxu0 0.0
    %165 = vmatpush.msra.mxu0 0.0
    %166 = vmatpush.msra.mxu0 0.0
    %167 = vmatpush.msra.mxu0 0.0
    %168 = vmatpush.msra.mxu0 0.0
    %169 = vmatpush.msra.mxu0 0.0
    %170 = vmatpush.msra.mxu0 0.0
    %171 = vmatpush.msra.mxu0 0.0
    %172 = vmatpush.msra.mxu0 0.0
    %173 = vmatpush.msra.mxu0 0.0
    %174 = vmatpush.msra.mxu0 0.0
    %175 = vmatpush.msra.mxu0 %v96
    %176 = vmatpush.msra.mxu0 %v92
    %177 = vmatmul.f32.gmra.mxu0 %v99
    %v178 = vpop.f32.mrf.mxu0
    %v179 = vadd.f32 0.0, %v178
    %180 = vdwg.mxu0
    %v181 = vld [vmem:[%s3] sm:$0xff]
    %v182 = vld [vmem:[%s3 + $0x8] sm:$0xff]
    %185 = vst [vmem:[#allocation1] ss:$2 sm:$0xff] %v181
    %s186 = scalar_lea.vmem [#allocation1], 16
    %187 = vst [vmem:[%s186] ss:$2 sm:$0xff] %v182
    %v188 = vld.sshfl [vmem:[#allocation1] sm:$0xff pattern:$0x75316420]
    %v189 = vld.sshfl [vmem:[#allocation1 + $0x8] sm:$0xff pattern:$0x75316420]
    %v190 = vld.sshfl [vmem:[#allocation1 + $0x10] sm:$0xff pattern:$0x75316420]
    %v191 = vld.sshfl [vmem:[#allocation1 + $0x18] sm:$0xff pattern:$0x75316420]
    %v196 = vmul.f32 %v119, %v188
    %v197 = vmul.f32 %v139, %v189
    %v198 = vmul.f32 %v159, %v190
    %v199 = vmul.f32 %v179, %v191
    %v200 = vld [vmem:[%s7] sm:$0xff]
    %v201 = vld [vmem:[%s7 + $0x8] sm:$0xff]
    %v202 = vld [vmem:[%s7 + $0x10] sm:$0xff]
    %v203 = vld [vmem:[%s7 + $0x18] sm:$0xff]
    %v204 = vld [vmem:[%s7 + $0x20] sm:$0xff]
    %v205 = vld [vmem:[%s7 + $0x28] sm:$0xff]
    %v206 = vld [vmem:[%s7 + $0x30] sm:$0xff]
    %v207 = vld [vmem:[%s7 + $0x38] sm:$0xff]
    %v208 = vld [vmem:[%s7 + $0x40] sm:$0xff]
    %v209 = vld [vmem:[%s7 + $0x48] sm:$0xff]
    %v210 = vld [vmem:[%s7 + $0x50] sm:$0xff]
    %v211 = vld [vmem:[%s7 + $0x58] sm:$0xff]
    %v212 = vld [vmem:[%s7 + $0x60] sm:$0xff]
    %v213 = vld [vmem:[%s7 + $0x68] sm:$0xff]
    %v214 = vld [vmem:[%s7 + $0x70] sm:$0xff]
    %v215 = vld [vmem:[%s7 + $0x78] sm:$0xff]
    %v216 = vld [vmem:[%s7 + $0x80] sm:$0xff]
    %v217 = vld [vmem:[%s7 + $0x88] sm:$0xff]
    %v218 = vld [vmem:[%s7 + $0x90] sm:$0xff]
    %v219 = vld [vmem:[%s7 + $0x98] sm:$0xff]
    %v220 = vld [vmem:[%s7 + $0xa0] sm:$0xff]
    %v221 = vld [vmem:[%s7 + $0xa8] sm:$0xff]
    %v222 = vld [vmem:[%s7 + $0xb0] sm:$0xff]
    %v223 = vld [vmem:[%s7 + $0xb8] sm:$0xff]
    %v224 = vld [vmem:[%s7 + $0xc0] sm:$0xff]
    %v225 = vld [vmem:[%s7 + $0xc8] sm:$0xff]
    %v226 = vld [vmem:[%s7 + $0xd0] sm:$0xff]
    %v227 = vld [vmem:[%s7 + $0xd8] sm:$0xff]
    %v228 = vld [vmem:[%s7 + $0xe0] sm:$0xff]
    %v229 = vld [vmem:[%s7 + $0xe8] sm:$0xff]
    %v230 = vld [vmem:[%s7 + $0xf0] sm:$0xff]
    %v231 = vld [vmem:[%s7 + $0xf8] sm:$0xff]
    %v232 = vld [vmem:[%s7 + $0x100] sm:$0xff]
    %v233 = vld [vmem:[%s7 + $0x108] sm:$0xff]
    %v234 = vld [vmem:[%s7 + $0x110] sm:$0xff]
    %v235 = vld [vmem:[%s7 + $0x118] sm:$0xff]
    %v236 = vld [vmem:[%s7 + $0x120] sm:$0xff]
    %v237 = vld [vmem:[%s7 + $0x128] sm:$0xff]
    %v238 = vld [vmem:[%s7 + $0x130] sm:$0xff]
    %v239 = vld [vmem:[%s7 + $0x138] sm:$0xff]
    %v240 = vld [vmem:[%s7 + $0x140] sm:$0xff]
    %v241 = vld [vmem:[%s7 + $0x148] sm:$0xff]
    %v242 = vld [vmem:[%s7 + $0x150] sm:$0xff]
    %v243 = vld [vmem:[%s7 + $0x158] sm:$0xff]
    %v244 = vld [vmem:[%s7 + $0x160] sm:$0xff]
    %v245 = vld [vmem:[%s7 + $0x168] sm:$0xff]
    %v246 = vld [vmem:[%s7 + $0x170] sm:$0xff]
    %v247 = vld [vmem:[%s7 + $0x178] sm:$0xff]
    %v248 = vld [vmem:[%s7 + $0x180] sm:$0xff]
    %v249 = vld [vmem:[%s7 + $0x188] sm:$0xff]
    %v250 = vld [vmem:[%s7 + $0x190] sm:$0xff]
    %v251 = vld [vmem:[%s7 + $0x198] sm:$0xff]
    %v252 = vld [vmem:[%s7 + $0x1a0] sm:$0xff]
    %v253 = vld [vmem:[%s7 + $0x1a8] sm:$0xff]
    %v254 = vld [vmem:[%s7 + $0x1b0] sm:$0xff]
    %v255 = vld [vmem:[%s7 + $0x1b8] sm:$0xff]
    %v256 = vld [vmem:[%s7 + $0x1c0] sm:$0xff]
    %v257 = vld [vmem:[%s7 + $0x1c8] sm:$0xff]
    %v258 = vld [vmem:[%s7 + $0x1d0] sm:$0xff]
    %v259 = vld [vmem:[%s7 + $0x1d8] sm:$0xff]
    %v260 = vld [vmem:[%s7 + $0x1e0] sm:$0xff]
    %v261 = vld [vmem:[%s7 + $0x1e8] sm:$0xff]
    %v262 = vld [vmem:[%s7 + $0x1f0] sm:$0xff]
    %v263 = vld [vmem:[%s7 + $0x1f8] sm:$0xff]
    %264 = vmatpush.msra.mxu0 %v215
    %265 = vmatpush.msra.mxu0 %v214
    %266 = vmatpush.msra.mxu0 %v213
    %267 = vmatpush.msra.mxu0 %v212
    %268 = vmatpush.msra.mxu0 %v211
    %269 = vmatpush.msra.mxu0 %v210
    %270 = vmatpush.msra.mxu0 %v209
    %271 = vmatpush.msra.mxu0 %v208
    %272 = vmatpush.msra.mxu0 %v207
    %273 = vmatpush.msra.mxu0 %v206
    %274 = vmatpush.msra.mxu0 %v205
    %275 = vmatpush.msra.mxu0 %v204
    %276 = vmatpush.msra.mxu0 %v203
    %277 = vmatpush.msra.mxu0 %v202
    %278 = vmatpush.msra.mxu0 %v201
    %279 = vmatpush.msra.mxu0 %v200
    %280 = vmatmul.f32.gmra.mxu0 %v196
    %v281 = vpop.f32.mrf.mxu0
    %v282 = vadd.f32 0.0, %v281
    %283 = vdwg.mxu0
    %284 = vmatpush.msra.mxu0 %v231
    %285 = vmatpush.msra.mxu0 %v230
    %286 = vmatpush.msra.mxu0 %v229
    %287 = vmatpush.msra.mxu0 %v228
    %288 = vmatpush.msra.mxu0 %v227
    %289 = vmatpush.msra.mxu0 %v226
    %290 = vmatpush.msra.mxu0 %v225
    %291 = vmatpush.msra.mxu0 %v224
    %292 = vmatpush.msra.mxu0 %v223
    %293 = vmatpush.msra.mxu0 %v222
    %294 = vmatpush.msra.mxu0 %v221
    %295 = vmatpush.msra.mxu0 %v220
    %296 = vmatpush.msra.mxu0 %v219
    %297 = vmatpush.msra.mxu0 %v218
    %298 = vmatpush.msra.mxu0 %v217
    %299 = vmatpush.msra.mxu0 %v216
    %300 = vmatmul.f32.gmra.mxu0 %v197
    %v301 = vpop.f32.mrf.mxu0
    %v302 = vadd.f32 %v282, %v301
    %303 = vdwg.mxu0
    %304 = vmatpush.msra.mxu0 %v247
    %305 = vmatpush.msra.mxu0 %v246
    %306 = vmatpush.msra.mxu0 %v245
    %307 = vmatpush.msra.mxu0 %v244
    %308 = vmatpush.msra.mxu0 %v243
    %309 = vmatpush.msra.mxu0 %v242
    %310 = vmatpush.msra.mxu0 %v241
    %311 = vmatpush.msra.mxu0 %v240
    %312 = vmatpush.msra.mxu0 %v239
    %313 = vmatpush.msra.mxu0 %v238
    %314 = vmatpush.msra.mxu0 %v237
    %315 = vmatpush.msra.mxu0 %v236
    %316 = vmatpush.msra.mxu0 %v235
    %317 = vmatpush.msra.mxu0 %v234
    %318 = vmatpush.msra.mxu0 %v233
    %319 = vmatpush.msra.mxu0 %v232
    %320 = vmatmul.f32.gmra.mxu0 %v198
    %v321 = vpop.f32.mrf.mxu0
    %v322 = vadd.f32 %v302, %v321
    %323 = vdwg.mxu0
    %324 = vmatpush.msra.mxu0 %v263
    %325 = vmatpush.msra.mxu0 %v262
    %326 = vmatpush.msra.mxu0 %v261
    %327 = vmatpush.msra.mxu0 %v260
    %328 = vmatpush.msra.mxu0 %v259
    %329 = vmatpush.msra.mxu0 %v258
    %330 = vmatpush.msra.mxu0 %v257
    %331 = vmatpush.msra.mxu0 %v256
    %332 = vmatpush.msra.mxu0 %v255
    %333 = vmatpush.msra.mxu0 %v254
    %334 = vmatpush.msra.mxu0 %v253
    %335 = vmatpush.msra.mxu0 %v252
    %336 = vmatpush.msra.mxu0 %v251
    %337 = vmatpush.msra.mxu0 %v250
    %338 = vmatpush.msra.mxu0 %v249
    %339 = vmatpush.msra.mxu0 %v248
    %340 = vmatmul.f32.gmra.mxu0 %v199
    %v341 = vpop.f32.mrf.mxu0
    %v342 = vadd.f32 %v322, %v341
    %343 = vdwg.mxu0
    %vm344 = vcmask 257024
    %345 = vst.msk [vmem:[#allocation4] sm:$0xf] %vm344, %v342
    %v346 = vld [vmem:[%s1] sm:$0xf]
    %v347 = vld [vmem:[%s4] sm:$0xff]
    %v348 = vld [vmem:[%s4 + $0x8] sm:$0xff]
    %v349 = vld [vmem:[%s4 + $0x10] sm:$0xff]
    %v350 = vld [vmem:[%s4 + $0x18] sm:$0xff]
    %v351 = vld [vmem:[%s4 + $0x20] sm:$0xff]
    %v352 = vld [vmem:[%s4 + $0x28] sm:$0xff]
    %v353 = vld [vmem:[%s4 + $0x30] sm:$0xff]
    %v354 = vld [vmem:[%s4 + $0x38] sm:$0xff]
    %v355 = vld [vmem:[%s4 + $0x40] sm:$0xff]
    %v356 = vld [vmem:[%s4 + $0x48] sm:$0xff]
    %v357 = vld [vmem:[%s4 + $0x50] sm:$0xff]
    %v358 = vld [vmem:[%s4 + $0x58] sm:$0xff]
    %v359 = vld [vmem:[%s4 + $0x60] sm:$0xff]
    %v360 = vld [vmem:[%s4 + $0x68] sm:$0xff]
    %v361 = vld [vmem:[%s4 + $0x70] sm:$0xff]
    %v362 = vld [vmem:[%s4 + $0x78] sm:$0xff]
    %v363 = vld [vmem:[%s4 + $0x80] sm:$0xff]
    %v364 = vld [vmem:[%s4 + $0x88] sm:$0xff]
    %v365 = vld [vmem:[%s4 + $0x90] sm:$0xff]
    %v366 = vld [vmem:[%s4 + $0x98] sm:$0xff]
    %v367 = vld [vmem:[%s4 + $0xa0] sm:$0xff]
    %v368 = vld [vmem:[%s4 + $0xa8] sm:$0xff]
    %v369 = vld [vmem:[%s4 + $0xb0] sm:$0xff]
    %v370 = vld [vmem:[%s4 + $0xb8] sm:$0xff]
    %v371 = vld [vmem:[%s4 + $0xc0] sm:$0xff]
    %v372 = vld [vmem:[%s4 + $0xc8] sm:$0xff]
    %v373 = vld [vmem:[%s4 + $0xd0] sm:$0xff]
    %v374 = vld [vmem:[%s4 + $0xd8] sm:$0xff]
    %v375 = vld [vmem:[%s4 + $0xe0] sm:$0xff]
    %v376 = vld [vmem:[%s4 + $0xe8] sm:$0xff]
    %v377 = vld [vmem:[%s4 + $0xf0] sm:$0xff]
    %v378 = vld [vmem:[%s4 + $0xf8] sm:$0xff]
    %v379 = vld [vmem:[%s5] sm:$0xff]
    %v381 = vperm.slane %v379, 0
    %v382 = vperm.slane %v379, 1
    %v383 = vperm.slane %v379, 2
    %v384 = vperm.slane %v379, 3
    %v385 = vperm.slane %v379, 4
    %v386 = vperm.slane %v379, 5
    %v387 = vperm.slane %v379, 6
    %v388 = vperm.slane %v379, 7
    %v398 = vsel %vm39, %v346, 0
    %400 = vmatpush.msra.mxu0 0.0
    %401 = vmatpush.msra.mxu0 0.0
    %402 = vmatpush.msra.mxu0 0.0
    %403 = vmatpush.msra.mxu0 0.0
    %404 = vmatpush.msra.mxu0 0.0
    %405 = vmatpush.msra.mxu0 0.0
    %406 = vmatpush.msra.mxu0 0.0
    %407 = vmatpush.msra.mxu0 0.0
    %408 = vmatpush.msra.mxu0 0.0
    %409 = vmatpush.msra.mxu0 0.0
    %410 = vmatpush.msra.mxu0 0.0
    %411 = vmatpush.msra.mxu0 0.0
    %412 = vmatpush.msra.mxu0 %v371
    %413 = vmatpush.msra.mxu0 %v363
    %414 = vmatpush.msra.mxu0 %v355
    %415 = vmatpush.msra.mxu0 %v347
    %416 = vmatmul.f32.gmra.mxu0 %v398
    %v417 = vpop.f32.mrf.mxu0
    %v418 = vadd.f32 %v381, %v417
    %419 = vdwg.mxu0
    %420 = vmatpush.msra.mxu0 0.0
    %421 = vmatpush.msra.mxu0 0.0
    %422 = vmatpush.msra.mxu0 0.0
    %423 = vmatpush.msra.mxu0 0.0
    %424 = vmatpush.msra.mxu0 0.0
    %425 = vmatpush.msra.mxu0 0.0
    %426 = vmatpush.msra.mxu0 0.0
    %427 = vmatpush.msra.mxu0 0.0
    %428 = vmatpush.msra.mxu0 0.0
    %429 = vmatpush.msra.mxu0 0.0
    %430 = vmatpush.msra.mxu0 0.0
    %431 = vmatpush.msra.mxu0 0.0
    %432 = vmatpush.msra.mxu0 %v372
    %433 = vmatpush.msra.mxu0 %v364
    %434 = vmatpush.msra.mxu0 %v356
    %435 = vmatpush.msra.mxu0 %v348
    %436 = vmatmul.f32.gmra.mxu0 %v398
    %v437 = vpop.f32.mrf.mxu0
    %v438 = vadd.f32 %v382, %v437
    %439 = vdwg.mxu0
    %440 = vmatpush.msra.mxu0 0.0
    %441 = vmatpush.msra.mxu0 0.0
    %442 = vmatpush.msra.mxu0 0.0
    %443 = vmatpush.msra.mxu0 0.0
    %444 = vmatpush.msra.mxu0 0.0
    %445 = vmatpush.msra.mxu0 0.0
    %446 = vmatpush.msra.mxu0 0.0
    %447 = vmatpush.msra.mxu0 0.0
    %448 = vmatpush.msra.mxu0 0.0
    %449 = vmatpush.msra.mxu0 0.0
    %450 = vmatpush.msra.mxu0 0.0
    %451 = vmatpush.msra.mxu0 0.0
    %452 = vmatpush.msra.mxu0 %v373
    %453 = vmatpush.msra.mxu0 %v365
    %454 = vmatpush.msra.mxu0 %v357
    %455 = vmatpush.msra.mxu0 %v349
    %456 = vmatmul.f32.gmra.mxu0 %v398
    %v457 = vpop.f32.mrf.mxu0
    %v458 = vadd.f32 %v383, %v457
    %459 = vdwg.mxu0
    %460 = vmatpush.msra.mxu0 0.0
    %461 = vmatpush.msra.mxu0 0.0
    %462 = vmatpush.msra.mxu0 0.0
    %463 = vmatpush.msra.mxu0 0.0
    %464 = vmatpush.msra.mxu0 0.0
    %465 = vmatpush.msra.mxu0 0.0
    %466 = vmatpush.msra.mxu0 0.0
    %467 = vmatpush.msra.mxu0 0.0
    %468 = vmatpush.msra.mxu0 0.0
    %469 = vmatpush.msra.mxu0 0.0
    %470 = vmatpush.msra.mxu0 0.0
    %471 = vmatpush.msra.mxu0 0.0
    %472 = vmatpush.msra.mxu0 %v374
    %473 = vmatpush.msra.mxu0 %v366
    %474 = vmatpush.msra.mxu0 %v358
    %475 = vmatpush.msra.mxu0 %v350
    %476 = vmatmul.f32.gmra.mxu0 %v398
    %v477 = vpop.f32.mrf.mxu0
    %v478 = vadd.f32 %v384, %v477
    %479 = vdwg.mxu0
    %480 = vmatpush.msra.mxu0 0.0
    %481 = vmatpush.msra.mxu0 0.0
    %482 = vmatpush.msra.mxu0 0.0
    %483 = vmatpush.msra.mxu0 0.0
    %484 = vmatpush.msra.mxu0 0.0
    %485 = vmatpush.msra.mxu0 0.0
    %486 = vmatpush.msra.mxu0 0.0
    %487 = vmatpush.msra.mxu0 0.0
    %488 = vmatpush.msra.mxu0 0.0
    %489 = vmatpush.msra.mxu0 0.0
    %490 = vmatpush.msra.mxu0 0.0
    %491 = vmatpush.msra.mxu0 0.0
    %492 = vmatpush.msra.mxu0 %v375
    %493 = vmatpush.msra.mxu0 %v367
    %494 = vmatpush.msra.mxu0 %v359
    %495 = vmatpush.msra.mxu0 %v351
    %496 = vmatmul.f32.gmra.mxu0 %v398
    %v497 = vpop.f32.mrf.mxu0
    %v498 = vadd.f32 %v385, %v497
    %499 = vdwg.mxu0
    %500 = vmatpush.msra.mxu0 0.0
    %501 = vmatpush.msra.mxu0 0.0
    %502 = vmatpush.msra.mxu0 0.0
    %503 = vmatpush.msra.mxu0 0.0
    %504 = vmatpush.msra.mxu0 0.0
    %505 = vmatpush.msra.mxu0 0.0
    %506 = vmatpush.msra.mxu0 0.0
    %507 = vmatpush.msra.mxu0 0.0
    %508 = vmatpush.msra.mxu0 0.0
    %509 = vmatpush.msra.mxu0 0.0
    %510 = vmatpush.msra.mxu0 0.0
    %511 = vmatpush.msra.mxu0 0.0
    %512 = vmatpush.msra.mxu0 %v376
    %513 = vmatpush.msra.mxu0 %v368
    %514 = vmatpush.msra.mxu0 %v360
    %515 = vmatpush.msra.mxu0 %v352
    %516 = vmatmul.f32.gmra.mxu0 %v398
    %v517 = vpop.f32.mrf.mxu0
    %v518 = vadd.f32 %v386, %v517
    %519 = vdwg.mxu0
    %520 = vmatpush.msra.mxu0 0.0
    %521 = vmatpush.msra.mxu0 0.0
    %522 = vmatpush.msra.mxu0 0.0
    %523 = vmatpush.msra.mxu0 0.0
    %524 = vmatpush.msra.mxu0 0.0
    %525 = vmatpush.msra.mxu0 0.0
    %526 = vmatpush.msra.mxu0 0.0
    %527 = vmatpush.msra.mxu0 0.0
    %528 = vmatpush.msra.mxu0 0.0
    %529 = vmatpush.msra.mxu0 0.0
    %530 = vmatpush.msra.mxu0 0.0
    %531 = vmatpush.msra.mxu0 0.0
    %532 = vmatpush.msra.mxu0 %v377
    %533 = vmatpush.msra.mxu0 %v369
    %534 = vmatpush.msra.mxu0 %v361
    %535 = vmatpush.msra.mxu0 %v353
    %536 = vmatmul.f32.gmra.mxu0 %v398
    %v537 = vpop.f32.mrf.mxu0
    %v538 = vadd.f32 %v387, %v537
    %539 = vdwg.mxu0
    %540 = vmatpush.msra.mxu0 0.0
    %541 = vmatpush.msra.mxu0 0.0
    %542 = vmatpush.msra.mxu0 0.0
    %543 = vmatpush.msra.mxu0 0.0
    %544 = vmatpush.msra.mxu0 0.0
    %545 = vmatpush.msra.mxu0 0.0
    %546 = vmatpush.msra.mxu0 0.0
    %547 = vmatpush.msra.mxu0 0.0
    %548 = vmatpush.msra.mxu0 0.0
    %549 = vmatpush.msra.mxu0 0.0
    %550 = vmatpush.msra.mxu0 0.0
    %551 = vmatpush.msra.mxu0 0.0
    %552 = vmatpush.msra.mxu0 %v378
    %553 = vmatpush.msra.mxu0 %v370
    %554 = vmatpush.msra.mxu0 %v362
    %555 = vmatpush.msra.mxu0 %v354
    %556 = vmatmul.f32.gmra.mxu0 %v398
    %v557 = vpop.f32.mrf.mxu0
    %v558 = vadd.f32 %v388, %v557
    %559 = vdwg.mxu0
    %v560 = vxor.u32 %v418, 2147483648
    %v561 = vxor.u32 %v438, 2147483648
    %v562 = vxor.u32 %v458, 2147483648
    %v563 = vxor.u32 %v478, 2147483648
    %v564 = vmul.f32 %v560, 1.442695
    %v565 = vpow.pop %v564
    %v566 = vmul.f32 %v561, 1.442695
    %v567 = vpow.pop %v566
    %v568 = vmul.f32 %v562, 1.442695
    %v569 = vpow.pop %v568
    %v570 = vmul.f32 %v563, 1.442695
    %v571 = vpow.pop %v570
    %v572 = vadd.f32 %v565, 1.0
    %v573 = vadd.f32 %v567, 1.0
    %v574 = vadd.f32 %v569, 1.0
    %v575 = vadd.f32 %v571, 1.0
    %v576 = vrcp.pop %v572
    %v577 = vmul.f32 %v572, %v576
    %v578 = vsub.f32 1.0, %v577
    %v579 = vmul.f32 %v576, %v578
    %v580 = vadd.f32 %v576, %v579
    %vm581 = vweird.f32 %v572
    %vm582 = vweird.f32 %v576
    %vm583 = vmor %vm581, %vm582
    %v584 = vsel %vm583, %v576, %v580
    %v585 = vand.u32 2147483647, %v572
    %vm586 = vcmp.eq.f32.partialorder %v585, 8.507059e+37
    %v587 = vand.u32 %v572, 2147483648
    %v588 = vor.u32 1.1754944e-38, %v587
    %v589 = vsel %vm586, %v588, %v584
    %v590 = vmul.f32 1.0, %v589
    %v591 = vrcp.pop %v573
    %v592 = vmul.f32 %v573, %v591
    %v593 = vsub.f32 1.0, %v592
    %v594 = vmul.f32 %v591, %v593
    %v595 = vadd.f32 %v591, %v594
    %vm596 = vweird.f32 %v573
    %vm597 = vweird.f32 %v591
    %vm598 = vmor %vm596, %vm597
    %v599 = vsel %vm598, %v591, %v595
    %v600 = vand.u32 2147483647, %v573
    %vm601 = vcmp.eq.f32.partialorder %v600, 8.507059e+37
    %v602 = vand.u32 %v573, 2147483648
    %v603 = vor.u32 1.1754944e-38, %v602
    %v604 = vsel %vm601, %v603, %v599
    %v605 = vmul.f32 1.0, %v604
    %v606 = vrcp.pop %v574
    %v607 = vmul.f32 %v574, %v606
    %v608 = vsub.f32 1.0, %v607
    %v609 = vmul.f32 %v606, %v608
    %v610 = vadd.f32 %v606, %v609
    %vm611 = vweird.f32 %v574
    %vm612 = vweird.f32 %v606
    %vm613 = vmor %vm611, %vm612
    %v614 = vsel %vm613, %v606, %v610
    %v615 = vand.u32 2147483647, %v574
    %vm616 = vcmp.eq.f32.partialorder %v615, 8.507059e+37
    %v617 = vand.u32 %v574, 2147483648
    %v618 = vor.u32 1.1754944e-38, %v617
    %v619 = vsel %vm616, %v618, %v614
    %v620 = vmul.f32 1.0, %v619
    %v621 = vrcp.pop %v575
    %v622 = vmul.f32 %v575, %v621
    %v623 = vsub.f32 1.0, %v622
    %v624 = vmul.f32 %v621, %v623
    %v625 = vadd.f32 %v621, %v624
    %vm626 = vweird.f32 %v575
    %vm627 = vweird.f32 %v621
    %vm628 = vmor %vm626, %vm627
    %v629 = vsel %vm628, %v621, %v625
    %v630 = vand.u32 2147483647, %v575
    %vm631 = vcmp.eq.f32.partialorder %v630, 8.507059e+37
    %v632 = vand.u32 %v575, 2147483648
    %v633 = vor.u32 1.1754944e-38, %v632
    %v634 = vsel %vm631, %v633, %v629
    %v635 = vmul.f32 1.0, %v634
    %v636 = vtanh.pop %v498
    %v637 = vtanh.pop %v518
    %v638 = vtanh.pop %v538
    %v639 = vtanh.pop %v558
    %v640 = vmul.f32 %v196, %v590
    %v641 = vmul.f32 %v197, %v605
    %v642 = vmul.f32 %v198, %v620
    %v643 = vmul.f32 %v199, %v635
    %v648 = vrot.slane %v641, 4
    %v649 = vrot.slane %v643, 4
    %vm650 = vcmask 1043456
    %v651 = vsel %vm650, %v640, %v648
    %v652 = vsel %vm650, %v642, %v649
    %v655 = vsub.f32 %v181, %v651
    %v656 = vsub.f32 %v182, %v652
    %v657 = vmul.f32 %v119, %v636
    %v658 = vmul.f32 %v139, %v637
    %v659 = vmul.f32 %v159, %v638
    %v660 = vmul.f32 %v179, %v639
    %v665 = vrot.slane %v658, 4
    %v666 = vrot.slane %v660, 4
    %v667 = vsel %vm650, %v657, %v665
    %v668 = vsel %vm650, %v659, %v666
    %v671 = vadd.f32 %v655, %v667
    %v672 = vadd.f32 %v656, %v668
    %673 = vst [vmem:[#allocation6] sm:$0xff] %v671
    %674 = vst [vmem:[#allocation6 + $0x8] sm:$0xff] %v672
    // Predicated region
    $region34: #{tpu_custom_call.1} parent=1 // pred_check
      _
    $region35: #{tpu_custom_call.1} parent=1 // pred_check_branch
      %676 = sbr.rel (0) target = $region37
    $region36: #{tpu_custom_call.1} parent=1 // pred_region
      %678 = vsyncadd [#allocation3], 0
      %s680 = sshll.u32 [#allocation2], 4
      %s681 = int_to_ptr.vmem [resolvable:$true] %s680
      %s682 = sshll.u32 %s8, 4
      %s683 = int_to_ptr.hbm [resolvable:$true] %s682
      %685 = dma.vmem_to_hbm [thread:$0]  %s681, 64, %s683, [#allocation3]
    $region37: #{tpu_custom_call.1} parent=1 // pred_fallthru
      _
    // Predicated region
    $region38: #{tpu_custom_call.1} parent=1 // pred_check
      _
    $region39: #{tpu_custom_call.1} parent=1 // pred_check_branch
      %687 = sbr.rel (0) target = $region41
    $region40: #{tpu_custom_call.1} parent=1 // pred_region
      %689 = vsyncadd [#allocation5], 0
      %s691 = sshll.u32 [#allocation4], 4
      %s692 = int_to_ptr.vmem [resolvable:$true] %s691
      %s693 = sshll.u32 %s9, 4
      %s694 = int_to_ptr.hbm [resolvable:$true] %s693
      %696 = dma.vmem_to_hbm [thread:$0]  %s692, 64, %s694, [#allocation5]
    $region41: #{tpu_custom_call.1} parent=1 // pred_fallthru
      _
    // Predicated region
    $region42: #{tpu_custom_call.1} parent=1 // pred_check
      _
    $region43: #{tpu_custom_call.1} parent=1 // pred_check_branch
      %698 = sbr.rel (0) target = $region45
    $region44: #{tpu_custom_call.1} parent=1 // pred_region
      %700 = vsyncadd [#allocation5], 0
      %s702 = sshll.u32 [#allocation6], 4
      %s703 = int_to_ptr.vmem [resolvable:$true] %s702
      %s704 = sshll.u32 %s10, 4
      %s705 = int_to_ptr.hbm [resolvable:$true] %s704
      %707 = dma.vmem_to_hbm [thread:$0]  %s703, 256, %s705, [#allocation5]
    $region45: #{tpu_custom_call.1} parent=1 // pred_fallthru
      _
    // Predicated region
    $region46: #{tpu_custom_call.1} parent=1 // pred_check
      _
    $region47: #{tpu_custom_call.1} parent=1 // pred_check_branch
      %709 = sbr.rel (0) target = $region49
    $region48: #{tpu_custom_call.1} parent=1 // pred_region
      %711 = dma.done [#allocation3], 64
    $region49: #{tpu_custom_call.1} parent=1 // pred_fallthru
      _
    // Predicated region
    $region50: #{tpu_custom_call.1} parent=1 // pred_check
      _
    $region51: #{tpu_custom_call.1} parent=1 // pred_check_branch
      %713 = sbr.rel (0) target = $region53
    $region52: #{tpu_custom_call.1} parent=1 // pred_region
      %715 = dma.done [#allocation5], 64
    $region53: #{tpu_custom_call.1} parent=1 // pred_fallthru
      _
    // Predicated region
    $region54: #{tpu_custom_call.1} parent=1 // pred_check
      _
    $region55: #{tpu_custom_call.1} parent=1 // pred_check_branch
      %717 = sbr.rel (0) target = $region57
    $region56: #{tpu_custom_call.1} parent=1 // pred_region
      %719 = dma.done [#allocation5], 256
    $region57: #{tpu_custom_call.1} parent=1 // pred_fallthru
      _
    %720 = vsyncpa [#allocation3], 1
    %721 = vsyncpa [#allocation5], 1

</llo_original>
